<compile_context>
chip_gen: v7x
topology: tpu7x:2x2x1
jax: 0.10.0
libtpu: 0.0.40
codegen_flags: <defaults>
</compile_context>

<pallas_src>
import functools

import jax
import jax.numpy as jnp
from jax.experimental import pallas as pl
from jax.experimental.pallas import tpu as pltpu


HIDDEN = 64                 # logical hidden width (matches nn.Linear(?, 64))
HP = 128                    # lane-padded hidden width
SEG_ALIGN = 16              # packed-param segment alignment (bf16: 2 rows/sublane)
MAX_BLOCK_B = 4096          # batch-tile cap (per-step-overhead bound, raised from 512)
TC_SPLIT_MIN_ROWS = 1024    # split a single tile in two once B >= this (v7x dual-TC)
DEEP_PIPELINE_MIN_STEPS = 4 # 3-deep x pipelining only for long grids


def _round_up(x, m):
    return (x + m - 1) // m * m


def _cdiv(a, b):
    return (a + b - 1) // b


def _choose_tb(batch, max_block_b=MAX_BLOCK_B, tc_split_min=TC_SPLIT_MIN_ROWS):
    """Balanced batch tile: no round_up(B, tb) padding waste, v7x-aware."""
    b8 = _round_up(max(batch, 1), 8)
    num_tiles = _cdiv(batch, max_block_b)
    if num_tiles <= 1:
        # Give both v7x TensorCores a tile once the batch is large enough to
        # amortize the ~0.35 us/step overhead; no effect on v5e/v6e.
        num_tiles = 2 if b8 >= tc_split_min else 1
    elif num_tiles % 2:
        num_tiles += 1  # even step count -> no 2+1 TC imbalance on v7x
    tb = _round_up(_cdiv(batch, num_tiles), 8)
    return min(tb, _round_up(max_block_b, 8))


# --------------------------------------------------------------------------
# Kernel: full 3-layer MLP on one [tb, input_dim] batch tile, params resident.
# --------------------------------------------------------------------------
def _qnet_kernel(x_ref, p_ref, o_ref, xp_ref, *, input_dim, in_p, hp, out_dim,
                 lane_dense_out):
    b_off = in_p + 2 * hp
    w1 = p_ref[0:in_p, :]                   # [in_p, hp]
    w2 = p_ref[in_p:in_p + hp, :]           # [hp,  hp]
    w3 = p_ref[in_p + hp:b_off, :]          # [hp,  hp] (cols >= out_dim are 0)
    b1 = p_ref[b_off + 0:b_off + 1, :].astype(jnp.float32)   # [1, hp]
    b2 = p_ref[b_off + 1:b_off + 2, :].astype(jnp.float32)   # [1, hp]
    b3 = p_ref[b_off + 2:b_off + 3, :].astype(jnp.float32)   # [1, hp]
    cdt = w1.dtype                          # matmul input dtype (f32 or bf16)

    if input_dim == in_p:
        x = x_ref[...]
    else:
        # Lane-pad x to the packed K inside VMEM.  Re-zero every step (tiny:
        # (tb, in_p) f32) so uninitialized scratch can never leak NaN/Inf into
        # the zero-weight pad rows, even when the grid is split across cores.
        xp_ref[...] = jnp.zeros_like(xp_ref)
        xp_ref[:, :input_dim] = x_ref[...]
        x = xp_ref[...]

    # fc1 + ReLU  (bias/ReLU in f32; MXU accumulates in f32)
    h = jnp.dot(x.astype(cdt), w1, preferred_element_type=jnp.float32)
    h = jnp.maximum(h + b1, 0.0)
    # fc2 + ReLU
    h = jnp.dot(h.astype(cdt), w2, preferred_element_type=jnp.float32)
    h = jnp.maximum(h + b2, 0.0)
    # fc3 (no activation)
    o = jnp.dot(h.astype(cdt), w3, preferred_element_type=jnp.float32) + b3

    if lane_dense_out:
        o_ref[...] = o.astype(o_ref.dtype)              # unmasked 128-lane vst
    else:
        o_ref[...] = o[:, :out_dim].astype(o_ref.dtype)  # narrow masked store


# --------------------------------------------------------------------------
# Wrapper: balanced batch grid, ragged last block handled by Pallas, resident
# packed params, no wrapper-side pad of x and no batch slice of the output.
# --------------------------------------------------------------------------
def qnetwork_forward(x, packed_params, *, out_dim, hp=HP,
                     max_block_b=MAX_BLOCK_B, lane_dense_out=True):
    B, input_dim = x.shape
    in_p = _round_up(input_dim, SEG_ALIGN)
    p_rows = in_p + 2 * hp + SEG_ALIGN
    assert out_dim <= hp, "output_dim must be <= lane-padded hidden width"
    assert packed_params.shape == (p_rows, hp), (
        f"packed_params shape {packed_params.shape} != expected {(p_rows, hp)}")

    tb = _choose_tb(B, max_block_b)
    grid_steps = _cdiv(B, tb)

    x_spec_kwargs = {}
    if grid_steps >= DEEP_PIPELINE_MIN_STEPS:
        # DMA-latency bound at long grids: keep an extra x tile in flight.
        x_spec_kwargs["pipeline_mode"] = pl.Buffered(3)
    x_spec = pl.BlockSpec((tb, input_dim), lambda i: (i, 0), **x_spec_kwargs)

    out_cols = hp if lane_dense_out else out_dim
    kernel = functools.partial(
        _qnet_kernel, input_dim=input_dim, in_p=in_p, hp=hp,
        out_dim=out_dim, lane_dense_out=lane_dense_out)

    out = pl.pallas_call(
        kernel,
        out_shape=jax.ShapeDtypeStruct((B, out_cols), jnp.float32),
        grid=(grid_steps,),
        in_specs=[
            # batch tile of activations (pipelined by the runtime)
            x_spec,
            # packed params: constant index_map -> fetched once, VMEM-resident
            pl.BlockSpec((p_rows, hp), lambda i: (0, 0)),
        ],
        out_specs=pl.BlockSpec((tb, out_cols), lambda i: (i, 0)),
        scratch_shapes=[pltpu.VMEM((tb, in_p), jnp.float32)],
        compiler_params=pltpu.CompilerParams(
            dimension_semantics=("parallel",),   # shard batch tiles across TCs (v7x)
        ),
    )(x, packed_params)

    if lane_dense_out and out_cols != out_dim:
        out = out[:, :out_dim]   # extra lanes are exact zeros; cheap lane slice
    return out


# --------------------------------------------------------------------------
# Parameter init (mimics nn.Linear U(-1/sqrt(fan_in), 1/sqrt(fan_in))) and
# packing into one 16-row-aligned, lane-padded [in_p + 2*HP + 16, HP] buffer.
# --------------------------------------------------------------------------
def init_params(key, input_dim, output_dim, hidden=HIDDEN):
    def linear(key, fan_in, fan_out):
        kw, kb = jax.random.split(key)
        bound = 1.0 / jnp.sqrt(jnp.float32(fan_in))
        w = jax.random.uniform(kw, (fan_in, fan_out), jnp.float32, -bound, bound)
        b = jax.random.uniform(kb, (1, fan_out), jnp.float32, -bound, bound)
        return w, b

    k1, k2, k3 = jax.random.split(key, 3)
    w1, b1 = linear(k1, input_dim, hidden)
    w2, b2 = linear(k2, hidden, hidden)
    w3, b3 = linear(k3, hidden, output_dim)
    return (w1, b1, w2, b2, w3, b3)


def pack_params(params, input_dim, output_dim, *, hidden=HIDDEN, hp=HP,
                dtype=jnp.float32):
    """Pack (w1,b1,w2,b2,w3,b3) into one [in_p + 2*hp + 16, hp] buffer.

    Segments are 16-row aligned (clean for bf16 sublane packing as well as
    f32); hidden/output dims zero-padded to hp lanes (zero weights + zero
    biases are inert through matmul/ReLU).
    """
    w1, b1, w2, b2, w3, b3 = params
    assert hidden <= hp, f"hidden ({hidden}) must be <= hp ({hp})"
    assert output_dim <= hp, f"output_dim ({output_dim}) must be <= hp ({hp})"
    in_p = _round_up(input_dim, SEG_ALIGN)
    w1p = jnp.zeros((in_p, hp), jnp.float32).at[:input_dim, :hidden].set(w1)
    w2p = jnp.zeros((hp, hp), jnp.float32).at[:hidden, :hidden].set(w2)
    w3p = jnp.zeros((hp, hp), jnp.float32).at[:hidden, :output_dim].set(w3)
    bias = jnp.zeros((SEG_ALIGN, hp), jnp.float32)
    bias = bias.at[0, :hidden].set(b1[0])
    bias = bias.at[1, :hidden].set(b2[0])
    bias = bias.at[2, :output_dim].set(b3[0])
    return jnp.concatenate([w1p, w2p, w3p, bias], axis=0).astype(dtype)


def reference_forward(x, params):
    w1, b1, w2, b2, w3, b3 = params
    h1 = jnp.maximum(x @ w1 + b1, 0.0)
    h2 = jnp.maximum(h1 @ w2 + b2, 0.0)
    return h2 @ w3 + b3


if __name__ == "__main__":
    # Small RL-ish shapes: batch of 8 states with 4 features, 2 actions.
    B, INPUT_DIM, OUTPUT_DIM = 8, 4, 2

    key = jax.random.PRNGKey(0)
    kx, kp = jax.random.split(key)
    x = jax.random.normal(kx, (B, INPUT_DIM), dtype=jnp.float32)
    params = init_params(kp, INPUT_DIM, OUTPUT_DIM)
    ref = reference_forward(x, params)

    # ---- f32 parameter path, single tile, lane-dense store ----------------
    packed_f32 = pack_params(params, INPUT_DIM, OUTPUT_DIM, dtype=jnp.float32)
    out = jax.block_until_ready(
        qnetwork_forward(x, packed_f32, out_dim=OUTPUT_DIM))
    assert out.shape == (B, OUTPUT_DIM)
    assert jnp.allclose(out, ref, atol=1e-4, rtol=1e-4)

    # ---- bf16 parameter path (MXU fast path, f32 accumulation) ------------
    # Accepted numeric contract: ~1e-1 (weights AND activations quantized).
    packed_bf16 = pack_params(params, INPUT_DIM, OUTPUT_DIM, dtype=jnp.bfloat16)
    out_bf16 = jax.block_until_ready(
        qnetwork_forward(x, packed_bf16, out_dim=OUTPUT_DIM))
    assert jnp.allclose(out_bf16, ref, atol=1e-1, rtol=1e-1)

    # ---- ragged multi-tile batch: 2 balanced tiles of 520 rows (both v7x
    # TCs busy), ragged last block masked by Pallas (no wrapper pad/slice) ---
    B2 = 1030
    x2 = jax.random.normal(kx, (B2, INPUT_DIM), dtype=jnp.float32)
    out2 = jax.block_until_ready(
        qnetwork_forward(x2, packed_f32, out_dim=OUTPUT_DIM))
    ref2 = reference_forward(x2, params)
    assert out2.shape == (B2, OUTPUT_DIM)
    assert jnp.allclose(out2, ref2, atol=1e-4, rtol=1e-4)

    # ---- long grid (4 even steps): exercises the 3-deep x pipeline and the
    # narrow-store output path ----------------------------------------------
    B3 = 9000
    x3 = jax.random.normal(kx, (B3, INPUT_DIM), dtype=jnp.float32)
    out3 = jax.block_until_ready(
        qnetwork_forward(x3, packed_f32, out_dim=OUTPUT_DIM,
                         lane_dense_out=False))
    ref3 = reference_forward(x3, params)
    assert out3.shape == (B3, OUTPUT_DIM)
    assert jnp.allclose(out3, ref3, atol=1e-4, rtol=1e-4)

    print("KERNEL_OK")
</pallas_src>

<mosaic_0001>
module attributes {stable_mosaic.version = 11 : i64} {
  func.func @_qnet_kernel(%arg0: i32, %arg1: memref<8x4xf32, #tpu.memory_space<vmem>>, %arg2: memref<288x128xf32, #tpu.memory_space<vmem>>, %arg3: memref<8x128xf32, #tpu.memory_space<vmem>>, %arg4: memref<8x16xf32, #tpu.memory_space<vmem>>) attributes {dimension_semantics = [#tpu.dimension_semantics<parallel>], iteration_bounds = array<i64: 1>, scalar_prefetch = 0 : i64, scratch_operands = 1 : i64, tpu.core_type = #tpu.core_type<tc>, window_params = [{transform_indices = @transform_0, window_bounds = array<i64: 8, 4>}, {pipeline_mode = #tpu.pipeline_mode<synchronous>, transform_indices = @transform_1, window_bounds = array<i64: 288, 128>}, {transform_indices = @transform_2, window_bounds = array<i64: 8, 128>}]} {
    %c0 = arith.constant 0 : index
    %c0_0 = arith.constant 0 : index
    %0 = vector.load %arg2[%c0, %c0_0] : memref<288x128xf32, #tpu.memory_space<vmem>>, vector<16x128xf32>
    %c16 = arith.constant 16 : index
    %c0_1 = arith.constant 0 : index
    %1 = vector.load %arg2[%c16, %c0_1] : memref<288x128xf32, #tpu.memory_space<vmem>>, vector<128x128xf32>
    %c144 = arith.constant 144 : index
    %c0_2 = arith.constant 0 : index
    %2 = vector.load %arg2[%c144, %c0_2] : memref<288x128xf32, #tpu.memory_space<vmem>>, vector<128x128xf32>
    %c272 = arith.constant 272 : index
    %c0_3 = arith.constant 0 : index
    %3 = vector.load %arg2[%c272, %c0_3] : memref<288x128xf32, #tpu.memory_space<vmem>>, vector<1x128xf32>
    %c273 = arith.constant 273 : index
    %c0_4 = arith.constant 0 : index
    %4 = vector.load %arg2[%c273, %c0_4] : memref<288x128xf32, #tpu.memory_space<vmem>>, vector<1x128xf32>
    %c274 = arith.constant 274 : index
    %c0_5 = arith.constant 0 : index
    %5 = vector.load %arg2[%c274, %c0_5] : memref<288x128xf32, #tpu.memory_space<vmem>>, vector<1x128xf32>
    %cst = arith.constant 0.000000e+00 : f32
    %6 = vector.broadcast %cst : f32 to vector<8x16xf32>
    %c0_6 = arith.constant 0 : index
    %c0_7 = arith.constant 0 : index
    %7 = vector.load %arg4[%c0_6, %c0_7] : memref<8x16xf32, #tpu.memory_space<vmem>>, vector<8x16xf32>
    tpu.vector_store %arg4[%c0_6, %c0_7], %6 {strides = array<i32>} : memref<8x16xf32, #tpu.memory_space<vmem>>, vector<8x16xf32>,
    %c0_8 = arith.constant 0 : index
    %c0_9 = arith.constant 0 : index
    %8 = vector.load %arg1[%c0_8, %c0_9] : memref<8x4xf32, #tpu.memory_space<vmem>>, vector<8x4xf32>
    %c0_10 = arith.constant 0 : index
    %c0_11 = arith.constant 0 : index
    %9 = vector.load %arg4[%c0_10, %c0_11] : memref<8x16xf32, #tpu.memory_space<vmem>>, vector<8x4xf32>
    tpu.vector_store %arg4[%c0_10, %c0_11], %8 {strides = array<i32>} : memref<8x16xf32, #tpu.memory_space<vmem>>, vector<8x4xf32>,
    %c0_12 = arith.constant 0 : index
    %c0_13 = arith.constant 0 : index
    %10 = vector.load %arg4[%c0_12, %c0_13] : memref<8x16xf32, #tpu.memory_space<vmem>>, vector<8x16xf32>
    %cst_14 = arith.constant dense<0.000000e+00> : vector<8x128xf32>
    %11 = tpu.matmul %10, %0, %cst_14 {dimension_numbers = #tpu.dot_dimension_numbers<[1], [0], [0], [1], [0, 0, 1, 1], [], []>} : vector<8x16xf32>, vector<16x128xf32>, vector<8x128xf32> -> vector<8x128xf32>
    %12 = vector.broadcast %3 : vector<1x128xf32> to vector<8x128xf32>
    %13 = arith.addf %11, %12 : vector<8x128xf32>
    %cst_15 = arith.constant 0.000000e+00 : f32
    %14 = vector.broadcast %cst_15 : f32 to vector<8x128xf32>
    %15 = arith.maximumf %13, %14 : vector<8x128xf32>
    %cst_16 = arith.constant dense<0.000000e+00> : vector<8x128xf32>
    %16 = tpu.matmul %15, %1, %cst_16 {dimension_numbers = #tpu.dot_dimension_numbers<[1], [0], [0], [1], [0, 0, 1, 1], [], []>} : vector<8x128xf32>, vector<128x128xf32>, vector<8x128xf32> -> vector<8x128xf32>
    %17 = vector.broadcast %4 : vector<1x128xf32> to vector<8x128xf32>
    %18 = arith.addf %16, %17 : vector<8x128xf32>
    %cst_17 = arith.constant 0.000000e+00 : f32
    %19 = vector.broadcast %cst_17 : f32 to vector<8x128xf32>
    %20 = arith.maximumf %18, %19 : vector<8x128xf32>
    %cst_18 = arith.constant dense<0.000000e+00> : vector<8x128xf32>
    %21 = tpu.matmul %20, %2, %cst_18 {dimension_numbers = #tpu.dot_dimension_numbers<[1], [0], [0], [1], [0, 0, 1, 1], [], []>} : vector<8x128xf32>, vector<128x128xf32>, vector<8x128xf32> -> vector<8x128xf32>
    %22 = vector.broadcast %5 : vector<1x128xf32> to vector<8x128xf32>
    %23 = arith.addf %21, %22 : vector<8x128xf32>
    %c0_19 = arith.constant 0 : index
    %c0_20 = arith.constant 0 : index
    %24 = vector.load %arg3[%c0_19, %c0_20] : memref<8x128xf32, #tpu.memory_space<vmem>>, vector<8x128xf32>
    tpu.vector_store %arg3[%c0_19, %c0_20], %23 {strides = array<i32>} : memref<8x128xf32, #tpu.memory_space<vmem>>, vector<8x128xf32>,
    return
  }
  func.func @transform_0(%arg0: i32) -> (i32, i32) {
    %c0_i32 = arith.constant 0 : i32
    %c0_i32_0 = arith.constant 0 : i32
    return %arg0, %c0_i32 : i32, i32
  }
  func.func @transform_1(%arg0: i32) -> (i32, i32) {
    %c0_i32 = arith.constant 0 : i32
    %c0_i32_0 = arith.constant 0 : i32
    %c0_i32_1 = arith.constant 0 : i32
    return %c0_i32, %c0_i32_0 : i32, i32
  }
  func.func @transform_2(%arg0: i32) -> (i32, i32) {
    %c0_i32 = arith.constant 0 : i32
    %c0_i32_0 = arith.constant 0 : i32
    return %arg0, %c0_i32 : i32, i32
  }
}

</mosaic_0001>

<llo_original>
// kernel: tpu_custom_call.1
$region0: #{tpu_custom_call.1}
  #allocation0 [shape = 'u32[]', space=smem, size = 0x4, offset = 0x4, fixed_abs, tag = 'smem constant byte address 0x4 - core index']
  #allocation1 [shape = 'u32[144,128]{1,0:T(1,128)}', space=vmem, size = 0x12000, scoped, tag = 'internal scratch']
  #allocation2 [shape = 'f32[8,16]{1,0:T(8,128)}', space=vmem, size = 0x1000, scoped, tag = 'scratch operand']
  %s0 = inlined_call_operand.vmem [shape: f32[8,4], index: 0, kind: input, shape index: {}]
  %s1 = inlined_call_operand.hbm [shape: f32[288,128], index: 1, kind: input, shape index: {}]
  %s2 = inlined_call_operand.hbm [shape: f32[8,128], index: 2, kind: output, shape index: {}]
  %s3 = sld [smem:[#allocation0]]
  $region22: #{tpu_custom_call.1} parent=0
    _
  %s5 = ssub.s32 1, %s3
  %s6 = scalar_select 0, %s5, %s3
  $region1: #{tpu_custom_call.1} parent=0
    #allocation3 [shape = 'u8[147456]{0}', space=vmem, size = 0x24000, scoped, tag = 'input window, operand 1, single buffered']
    #allocation4 [shape = 's32[1]{0}', space=sflag, size = 0x4, scoped, tag = 'scoped memory for tpu_custom_call.1']
    #allocation5 [shape = 's32[1]{0}', space=sflag, size = 0x4, scoped, tag = 'scoped memory for tpu_custom_call.1']
    #allocation6 [shape = 'u8[4096]{0}', space=vmem, size = 0x1000, scoped, tag = 'output window, operand 0, single buffered']
    %7 = vsyncpa [#allocation4], 0
    %8 = vsyncpa [#allocation5], 0
    // Predicated region
    $region2: #{tpu_custom_call.1} parent=1 // pred_check
      _
    $region3: #{tpu_custom_call.1} parent=1 // pred_check_branch
      %10 = sbr.rel (0) target = $region5
    $region4: #{tpu_custom_call.1} parent=1 // pred_region
      _
    $region5: #{tpu_custom_call.1} parent=1 // pred_fallthru
      _
    // Predicated region
    $region6: #{tpu_custom_call.1} parent=1 // pred_check
      _
    $region7: #{tpu_custom_call.1} parent=1 // pred_check_branch
      %12 = sbr.rel (0) target = $region9
    $region8: #{tpu_custom_call.1} parent=1 // pred_region
      %s14 = ssub.s32 4608, 4608
      %15 = vsyncadd [#allocation4], %s14
      %s16 = sshll.u32 [#allocation3], 4
      %s17 = int_to_ptr.vmem [resolvable:$true] %s16
      %22 = dma.hbm_to_vmem [thread:$0]  %s1, 4608, %s17, [#allocation4], 128, 128, 8
    $region9: #{tpu_custom_call.1} parent=1 // pred_fallthru
      _
    // Predicated region
    $region10: #{tpu_custom_call.1} parent=1 // pred_check
      _
    $region11: #{tpu_custom_call.1} parent=1 // pred_check_branch
      %24 = sbr.rel (0) target = $region13
    $region12: #{tpu_custom_call.1} parent=1 // pred_region
      %25 = dma.done [#allocation4], 4608
    $region13: #{tpu_custom_call.1} parent=1 // pred_fallthru
      _
    %v26 = vld [vmem:[#allocation3] sm:$0xff]
    %v27 = vld [vmem:[#allocation3 + $0x8] sm:$0xff]
    %v28 = vld [vmem:[#allocation3 + $0x10] sm:$0xff]
    %v29 = vld [vmem:[#allocation3 + $0x18] sm:$0xff]
    %v30 = vld [vmem:[#allocation3 + $0x20] sm:$0xff]
    %v31 = vld [vmem:[#allocation3 + $0x28] sm:$0xff]
    %v32 = vld [vmem:[#allocation3 + $0x30] sm:$0xff]
    %v33 = vld [vmem:[#allocation3 + $0x38] sm:$0xff]
    %v34 = vld [vmem:[#allocation3 + $0x40] sm:$0xff]
    %v35 = vld [vmem:[#allocation3 + $0x48] sm:$0xff]
    %v36 = vld [vmem:[#allocation3 + $0x50] sm:$0xff]
    %v37 = vld [vmem:[#allocation3 + $0x58] sm:$0xff]
    %v38 = vld [vmem:[#allocation3 + $0x60] sm:$0xff]
    %v39 = vld [vmem:[#allocation3 + $0x68] sm:$0xff]
    %v40 = vld [vmem:[#allocation3 + $0x70] sm:$0xff]
    %v41 = vld [vmem:[#allocation3 + $0x78] sm:$0xff]
    %v42 = vld [vmem:[#allocation3 + $0x80] sm:$0xff]
    %v43 = vld [vmem:[#allocation3 + $0x88] sm:$0xff]
    %v44 = vld [vmem:[#allocation3 + $0x90] sm:$0xff]
    %v45 = vld [vmem:[#allocation3 + $0x98] sm:$0xff]
    %v46 = vld [vmem:[#allocation3 + $0xa0] sm:$0xff]
    %v47 = vld [vmem:[#allocation3 + $0xa8] sm:$0xff]
    %v48 = vld [vmem:[#allocation3 + $0xb0] sm:$0xff]
    %v49 = vld [vmem:[#allocation3 + $0xb8] sm:$0xff]
    %v50 = vld [vmem:[#allocation3 + $0xc0] sm:$0xff]
    %v51 = vld [vmem:[#allocation3 + $0xc8] sm:$0xff]
    %v52 = vld [vmem:[#allocation3 + $0xd0] sm:$0xff]
    %v53 = vld [vmem:[#allocation3 + $0xd8] sm:$0xff]
    %v54 = vld [vmem:[#allocation3 + $0xe0] sm:$0xff]
    %v55 = vld [vmem:[#allocation3 + $0xe8] sm:$0xff]
    %v56 = vld [vmem:[#allocation3 + $0xf0] sm:$0xff]
    %v57 = vld [vmem:[#allocation3 + $0xf8] sm:$0xff]
    %v58 = vld [vmem:[#allocation3 + $0x100] sm:$0xff]
    %v59 = vld [vmem:[#allocation3 + $0x108] sm:$0xff]
    %v60 = vld [vmem:[#allocation3 + $0x110] sm:$0x1]
    %v61 = vld [vmem:[#allocation3 + $0x111] sm:$0x1]
    %v62 = vld [vmem:[#allocation3 + $0x112] sm:$0x1]
    %vm63 = vcmask 130048
    %64 = vst.msk [vmem:[#allocation2] sm:$0xff] %vm63, 0.0
    %v65 = vld [vmem:[%s0] sm:$0xff]
    %vm66 = vcmask 31744
    %67 = vst.msk [vmem:[#allocation2] sm:$0xff] %vm66, %v65
    %v68 = vld [vmem:[#allocation2] sm:$0xff]
    %v69 = vlaneseq
    %v70 = vshrl.u32 %v69, 7
    %v71 = vsub.s32 0, %v70
    %v72 = vrot.slane %v60, %v71
    %v74 = vsel %vm63, %v68, 0
    %76 = vmatprep.subr.mxu0 0.0
    %77 = vmatpush1.msra.mxu0 %v26
    %78 = vmatprep.subr.mxu0 0.0
    %79 = vmatpush1.msra.mxu0 %v27
    %80 = vmatprep.subr.mxu0 0.0
    %81 = vmatpush1.msra.mxu0 0.0
    %82 = vmatprep.subr.mxu0 0.0
    %83 = vmatpush1.msra.mxu0 0.0
    %84 = vmatprep.subr.mxu0 0.0
    %85 = vmatpush1.msra.mxu0 0.0
    %86 = vmatprep.subr.mxu0 0.0
    %87 = vmatpush1.msra.mxu0 0.0
    %88 = vmatprep.subr.mxu0 0.0
    %89 = vmatpush1.msra.mxu0 0.0
    %90 = vmatprep.subr.mxu0 0.0
    %91 = vmatpush1.msra.mxu0 0.0
    %92 = vmatprep.subr.mxu0 0.0
    %93 = vmatpush1.msra.mxu0 0.0
    %94 = vmatprep.subr.mxu0 0.0
    %95 = vmatpush1.msra.mxu0 0.0
    %96 = vmatprep.subr.mxu0 0.0
    %97 = vmatpush1.msra.mxu0 0.0
    %98 = vmatprep.subr.mxu0 0.0
    %99 = vmatpush1.msra.mxu0 0.0
    %100 = vmatprep.subr.mxu0 0.0
    %101 = vmatpush1.msra.mxu0 0.0
    %102 = vmatprep.subr.mxu0 0.0
    %103 = vmatpush1.msra.mxu0 0.0
    %104 = vmatprep.subr.mxu0 0.0
    %105 = vmatpush1.msra.mxu0 0.0
    %106 = vmatprep.subr.mxu0 0.0
    %107 = vmatpush1.msra.mxu0 0.0
    %108 = vmatprep.subr.mxu0 0.0
    %109 = vmatpush1.msra.mxu0 0.0
    %110 = vmatprep.subr.mxu0 0.0
    %111 = vmatpush1.msra.mxu0 0.0
    %112 = vmatprep.subr.mxu0 0.0
    %113 = vmatpush1.msra.mxu0 0.0
    %114 = vmatprep.subr.mxu0 0.0
    %115 = vmatpush1.msra.mxu0 0.0
    %116 = vmatprep.subr.mxu0 0.0
    %117 = vmatpush1.msra.mxu0 0.0
    %118 = vmatprep.subr.mxu0 0.0
    %119 = vmatpush1.msra.mxu0 0.0
    %120 = vmatprep.subr.mxu0 0.0
    %121 = vmatpush1.msra.mxu0 0.0
    %122 = vmatprep.subr.mxu0 0.0
    %123 = vmatpush1.msra.mxu0 0.0
    %124 = vmatprep.subr.mxu0 0.0
    %125 = vmatpush1.msra.mxu0 0.0
    %126 = vmatprep.subr.mxu0 0.0
    %127 = vmatpush1.msra.mxu0 0.0
    %128 = vmatprep.subr.mxu0 0.0
    %129 = vmatpush1.msra.mxu0 0.0
    %130 = vmatprep.subr.mxu0 0.0
    %131 = vmatpush1.msra.mxu0 0.0
    %132 = vmatprep.subr.mxu0 0.0
    %133 = vmatpush1.msra.mxu0 0.0
    %134 = vmatprep.subr.mxu0 0.0
    %135 = vmatpush1.msra.mxu0 0.0
    %136 = vmatprep.subr.mxu0 0.0
    %137 = vmatpush1.msra.mxu0 0.0
    %138 = vmatprep.subr.mxu0 0.0
    %139 = vmatpush1.msra.mxu0 0.0
    %140 = vmatprep.mubr.f32.mxu0 0.0
    %141 = vmatmul.mubr.f32.gmra.mrb[0].mxu0 %v74
    %v142 = vpop.f32.mrb[0].mxu0
    %v143 = vadd.f32 %v72, %v142
    %v144 = vpop.f32.mrb[0].mxu0
    %145 = vdwg.mxu0
    %v146 = vmax.f32 %v143, 0.0
    %v147 = vlaneseq
    %v148 = vshrl.u32 %v147, 7
    %v149 = vsub.s32 0, %v148
    %v150 = vrot.slane %v61, %v149
    %151 = vmatprep.subr.mxu0 0.0
    %152 = vmatpush1.msra.mxu0 %v28
    %153 = vmatprep.subr.mxu0 0.0
    %154 = vmatpush1.msra.mxu0 %v29
    %155 = vmatprep.subr.mxu0 0.0
    %156 = vmatpush1.msra.mxu0 %v30
    %157 = vmatprep.subr.mxu0 0.0
    %158 = vmatpush1.msra.mxu0 %v31
    %159 = vmatprep.subr.mxu0 0.0
    %160 = vmatpush1.msra.mxu0 %v32
    %161 = vmatprep.subr.mxu0 0.0
    %162 = vmatpush1.msra.mxu0 %v33
    %163 = vmatprep.subr.mxu0 0.0
    %164 = vmatpush1.msra.mxu0 %v34
    %165 = vmatprep.subr.mxu0 0.0
    %166 = vmatpush1.msra.mxu0 %v35
    %167 = vmatprep.subr.mxu0 0.0
    %168 = vmatpush1.msra.mxu0 %v36
    %169 = vmatprep.subr.mxu0 0.0
    %170 = vmatpush1.msra.mxu0 %v37
    %171 = vmatprep.subr.mxu0 0.0
    %172 = vmatpush1.msra.mxu0 %v38
    %173 = vmatprep.subr.mxu0 0.0
    %174 = vmatpush1.msra.mxu0 %v39
    %175 = vmatprep.subr.mxu0 0.0
    %176 = vmatpush1.msra.mxu0 %v40
    %177 = vmatprep.subr.mxu0 0.0
    %178 = vmatpush1.msra.mxu0 %v41
    %179 = vmatprep.subr.mxu0 0.0
    %180 = vmatpush1.msra.mxu0 %v42
    %181 = vmatprep.subr.mxu0 0.0
    %182 = vmatpush1.msra.mxu0 %v43
    %183 = vmatprep.subr.mxu0 0.0
    %184 = vmatpush1.msra.mxu0 0.0
    %185 = vmatprep.subr.mxu0 0.0
    %186 = vmatpush1.msra.mxu0 0.0
    %187 = vmatprep.subr.mxu0 0.0
    %188 = vmatpush1.msra.mxu0 0.0
    %189 = vmatprep.subr.mxu0 0.0
    %190 = vmatpush1.msra.mxu0 0.0
    %191 = vmatprep.subr.mxu0 0.0
    %192 = vmatpush1.msra.mxu0 0.0
    %193 = vmatprep.subr.mxu0 0.0
    %194 = vmatpush1.msra.mxu0 0.0
    %195 = vmatprep.subr.mxu0 0.0
    %196 = vmatpush1.msra.mxu0 0.0
    %197 = vmatprep.subr.mxu0 0.0
    %198 = vmatpush1.msra.mxu0 0.0
    %199 = vmatprep.subr.mxu0 0.0
    %200 = vmatpush1.msra.mxu0 0.0
    %201 = vmatprep.subr.mxu0 0.0
    %202 = vmatpush1.msra.mxu0 0.0
    %203 = vmatprep.subr.mxu0 0.0
    %204 = vmatpush1.msra.mxu0 0.0
    %205 = vmatprep.subr.mxu0 0.0
    %206 = vmatpush1.msra.mxu0 0.0
    %207 = vmatprep.subr.mxu0 0.0
    %208 = vmatpush1.msra.mxu0 0.0
    %209 = vmatprep.subr.mxu0 0.0
    %210 = vmatpush1.msra.mxu0 0.0
    %211 = vmatprep.subr.mxu0 0.0
    %212 = vmatpush1.msra.mxu0 0.0
    %213 = vmatprep.subr.mxu0 0.0
    %214 = vmatpush1.msra.mxu0 0.0
    %215 = vmatprep.mubr.f32.mxu0 0.0
    %216 = vmatmul.mubr.f32.gmra.mrb[0].mxu0 %v146
    %v217 = vpop.f32.mrb[0].mxu0
    %v218 = vadd.f32 %v150, %v217
    %v219 = vpop.f32.mrb[0].mxu0
    %220 = vdwg.mxu0
    %v221 = vmax.f32 %v218, 0.0
    %v222 = vlaneseq
    %v223 = vshrl.u32 %v222, 7
    %v224 = vsub.s32 0, %v223
    %v225 = vrot.slane %v62, %v224
    %226 = vmatprep.subr.mxu0 0.0
    %227 = vmatpush1.msra.mxu0 %v44
    %228 = vmatprep.subr.mxu0 0.0
    %229 = vmatpush1.msra.mxu0 %v45
    %230 = vmatprep.subr.mxu0 0.0
    %231 = vmatpush1.msra.mxu0 %v46
    %232 = vmatprep.subr.mxu0 0.0
    %233 = vmatpush1.msra.mxu0 %v47
    %234 = vmatprep.subr.mxu0 0.0
    %235 = vmatpush1.msra.mxu0 %v48
    %236 = vmatprep.subr.mxu0 0.0
    %237 = vmatpush1.msra.mxu0 %v49
    %238 = vmatprep.subr.mxu0 0.0
    %239 = vmatpush1.msra.mxu0 %v50
    %240 = vmatprep.subr.mxu0 0.0
    %241 = vmatpush1.msra.mxu0 %v51
    %242 = vmatprep.subr.mxu0 0.0
    %243 = vmatpush1.msra.mxu0 %v52
    %244 = vmatprep.subr.mxu0 0.0
    %245 = vmatpush1.msra.mxu0 %v53
    %246 = vmatprep.subr.mxu0 0.0
    %247 = vmatpush1.msra.mxu0 %v54
    %248 = vmatprep.subr.mxu0 0.0
    %249 = vmatpush1.msra.mxu0 %v55
    %250 = vmatprep.subr.mxu0 0.0
    %251 = vmatpush1.msra.mxu0 %v56
    %252 = vmatprep.subr.mxu0 0.0
    %253 = vmatpush1.msra.mxu0 %v57
    %254 = vmatprep.subr.mxu0 0.0
    %255 = vmatpush1.msra.mxu0 %v58
    %256 = vmatprep.subr.mxu0 0.0
    %257 = vmatpush1.msra.mxu0 %v59
    %258 = vmatprep.subr.mxu0 0.0
    %259 = vmatpush1.msra.mxu0 0.0
    %260 = vmatprep.subr.mxu0 0.0
    %261 = vmatpush1.msra.mxu0 0.0
    %262 = vmatprep.subr.mxu0 0.0
    %263 = vmatpush1.msra.mxu0 0.0
    %264 = vmatprep.subr.mxu0 0.0
    %265 = vmatpush1.msra.mxu0 0.0
    %266 = vmatprep.subr.mxu0 0.0
    %267 = vmatpush1.msra.mxu0 0.0
    %268 = vmatprep.subr.mxu0 0.0
    %269 = vmatpush1.msra.mxu0 0.0
    %270 = vmatprep.subr.mxu0 0.0
    %271 = vmatpush1.msra.mxu0 0.0
    %272 = vmatprep.subr.mxu0 0.0
    %273 = vmatpush1.msra.mxu0 0.0
    %274 = vmatprep.subr.mxu0 0.0
    %275 = vmatpush1.msra.mxu0 0.0
    %276 = vmatprep.subr.mxu0 0.0
    %277 = vmatpush1.msra.mxu0 0.0
    %278 = vmatprep.subr.mxu0 0.0
    %279 = vmatpush1.msra.mxu0 0.0
    %280 = vmatprep.subr.mxu0 0.0
    %281 = vmatpush1.msra.mxu0 0.0
    %282 = vmatprep.subr.mxu0 0.0
    %283 = vmatpush1.msra.mxu0 0.0
    %284 = vmatprep.subr.mxu0 0.0
    %285 = vmatpush1.msra.mxu0 0.0
    %286 = vmatprep.subr.mxu0 0.0
    %287 = vmatpush1.msra.mxu0 0.0
    %288 = vmatprep.subr.mxu0 0.0
    %289 = vmatpush1.msra.mxu0 0.0
    %290 = vmatprep.mubr.f32.mxu0 0.0
    %291 = vmatmul.mubr.f32.gmra.mrb[0].mxu0 %v221
    %v292 = vpop.f32.mrb[0].mxu0
    %v293 = vadd.f32 %v225, %v292
    %v294 = vpop.f32.mrb[0].mxu0
    %295 = vdwg.mxu0
    %296 = vst [vmem:[#allocation6] sm:$0xff] %v293
    // Predicated region
    $region14: #{tpu_custom_call.1} parent=1 // pred_check
      _
    $region15: #{tpu_custom_call.1} parent=1 // pred_check_branch
      %298 = sbr.rel (0) target = $region17
    $region16: #{tpu_custom_call.1} parent=1 // pred_region
      %s300 = ssub.s32 128, 128
      %301 = vsyncadd [#allocation5], %s300
      %s303 = sshll.u32 [#allocation6], 4
      %s304 = int_to_ptr.vmem [resolvable:$true] %s303
      %306 = dma.vmem_to_hbm [thread:$0]  %s304, 128, %s2, [#allocation5]
    $region17: #{tpu_custom_call.1} parent=1 // pred_fallthru
      _
    // Predicated region
    $region18: #{tpu_custom_call.1} parent=1 // pred_check
      _
    $region19: #{tpu_custom_call.1} parent=1 // pred_check_branch
      %308 = sbr.rel (0) target = $region21
    $region20: #{tpu_custom_call.1} parent=1 // pred_region
      %309 = dma.done [#allocation5], 128
    $region21: #{tpu_custom_call.1} parent=1 // pred_fallthru
      _
    %310 = vsyncpa [#allocation4], 1
    %311 = vsyncpa [#allocation5], 1

</llo_original>
